<compile_context>
chip_gen: v7x
topology: tpu7x:2x2x1
jax: 0.10.0
libtpu: 0.0.40
codegen_flags: <defaults>
</compile_context>

<pallas_src>
import numpy as np
import jax
import jax.numpy as jnp
from jax.experimental import pallas as pl
from jax.experimental.pallas import tpu as pltpu


def cat_linear_kernel(x_ref, off_ref, table_ref, bias_ref, out_ref, acc_ref):
    # x_ref     : (TB, F)  int32  VMEM  (categorical ids for this batch tile)
    # off_ref   : (1, F)   int32  VMEM  (cumulative per-feature offsets)
    # table_ref : (TV, D)  f32    VMEM  (current vocab tile of the table)
    # bias_ref  : (1, D)   f32    VMEM
    # out_ref   : (TB, D)  f32    (written once, on the last vocab tile)
    # acc_ref   : (TB, D)  f32    VMEM scratch accumulator
    j = pl.program_id(1)                                   # vocab-tile index
    TB, F = x_ref.shape
    TV = table_ref.shape[0]

    @pl.when(j == 0)
    def _():
        acc_ref[...] = jnp.zeros_like(acc_ref)

    # idx[b, f] = x_cat[b, f] + offsets[f], rebased into this vocab tile.
    idx_local = (x_ref[...] + off_ref[...]) - j * TV       # (TB, F) int32

    # One-hot count matrix over the local (lane-aligned) vocab tile.
    lane_v = jax.lax.broadcasted_iota(jnp.int32, (TB, TV), 1)
    counts = jnp.zeros((TB, TV), jnp.float32)
    for f in range(F):                    # F is small & static -> unrolled
        counts = counts + (idx_local[:, f:f + 1] == lane_v).astype(jnp.float32)

    # sum_f table[idx[b, f], :]  ==  counts @ table_tile  (MXU), accumulated
    # over vocab tiles in the scratch accumulator.
    acc_ref[...] += jnp.dot(counts, table_ref[...],
                            preferred_element_type=jnp.float32)

    @pl.when(j == pl.num_programs(1) - 1)
    def _():
        out_ref[...] = (acc_ref[...] + bias_ref[...]).astype(out_ref.dtype)


def cat_linear(x_cat, offsets, table, bias, *, block_b=128, block_v=512):
    """Pallas equivalent of CatLinear.forward: (B, F) int -> (B, d_out) f32."""
    assert block_b % 8 == 0, "batch tile must be a multiple of 8 sublanes"
    assert block_v % 128 == 0, "vocab tile must be a multiple of 128 lanes"
    B, F = x_cat.shape
    V, D = table.shape

    TB = block_b
    B_pad = pl.cdiv(B, TB) * TB                 # pad batch to whole tiles
    TV = min(block_v, pl.cdiv(V, 128) * 128)    # vocab tile (lane aligned)
    V_pad = pl.cdiv(V, TV) * TV                 # pad vocab to whole tiles

    x_p = jnp.pad(x_cat.astype(jnp.int32), ((0, B_pad - B), (0, 0)))
    table_p = jnp.pad(table.astype(jnp.float32), ((0, V_pad - V), (0, 0)))
    off_2d = offsets.astype(jnp.int32).reshape(1, F)
    bias_2d = bias.astype(jnp.float32).reshape(1, D)

    grid_spec = pltpu.PrefetchScalarGridSpec(
        num_scalar_prefetch=0,
        grid=(B_pad // TB, V_pad // TV),
        in_specs=[
            pl.BlockSpec((TB, F), lambda i, j: (i, 0)),     # ids (resident over j)
            pl.BlockSpec((1, F), lambda i, j: (0, 0)),      # offsets (constant)
            pl.BlockSpec((TV, D), lambda i, j: (j, 0)),     # table tile (streams)
            pl.BlockSpec((1, D), lambda i, j: (0, 0)),      # bias (constant)
        ],
        out_specs=pl.BlockSpec((TB, D), lambda i, j: (i, 0)),
        scratch_shapes=[pltpu.VMEM((TB, D), jnp.float32)],
    )

    out_padded = pl.pallas_call(
        cat_linear_kernel,
        out_shape=jax.ShapeDtypeStruct((B_pad, D), jnp.float32),
        grid_spec=grid_spec,
        compiler_params=pltpu.CompilerParams(
            dimension_semantics=("parallel", "arbitrary"),
            vmem_limit_bytes=32 * 1024 * 1024,
        ),
    )(x_p, off_2d, table_p, bias_2d)

    return out_padded[:B]


def _reference(x_cat, offsets, table, bias):
    gathered = jnp.take(table, x_cat + offsets[None, :], axis=0)   # (B, F, D)
    return jnp.sum(gathered, axis=1) + bias[None, :]               # (B, D)


def _make_inputs(key, categories, d_out, batch):
    vocab = sum(categories)
    num_features = len(categories)
    k_w, k_b, k_x = jax.random.split(key, 3)
    table = jax.random.normal(k_w, (vocab, d_out), jnp.float32)
    bias = 0.1 * jax.random.normal(k_b, (d_out,), jnp.float32)
    offsets = jnp.asarray(np.cumsum([0] + categories[:-1]), dtype=jnp.int32)
    keys = jax.random.split(k_x, num_features)
    cols = [
        jax.random.randint(keys[i], (batch, 1), 0, categories[i], dtype=jnp.int32)
        for i in range(num_features)
    ]
    x_cat = jnp.concatenate(cols, axis=1)
    return x_cat, offsets, table, bias


if __name__ == "__main__":
    key = jax.random.PRNGKey(0)
    k1, k2 = jax.random.split(key)

    # Test 1: small synthetic version of the Criteo categorical columns
    # (single vocab tile, ragged batch -> exercises batch padding).
    x_cat, offsets, table, bias = _make_inputs(k1, [7, 5, 11, 3], d_out=1, batch=100)
    out = jax.block_until_ready(cat_linear(x_cat, offsets, table, bias,
                                           block_b=64, block_v=128))
    ref = _reference(x_cat, offsets, table, bias)
    np.testing.assert_allclose(np.asarray(out), np.asarray(ref),
                               rtol=1e-5, atol=1e-5)

    # Test 2: larger vocabulary so the table spans several vocab tiles
    # (exercises the reduction grid axis + accumulator path).
    x_cat2, offsets2, table2, bias2 = _make_inputs(k2, [150, 90, 40, 20],
                                                   d_out=4, batch=200)
    out2 = jax.block_until_ready(cat_linear(x_cat2, offsets2, table2, bias2,
                                            block_b=64, block_v=128))
    ref2 = _reference(x_cat2, offsets2, table2, bias2)
    np.testing.assert_allclose(np.asarray(out2), np.asarray(ref2),
                               rtol=1e-5, atol=1e-5)

    print("KERNEL_OK")
</pallas_src>

<mosaic_0001>
module attributes {stable_mosaic.version = 11 : i64} {
  func.func @cat_linear_kernel(%arg0: i32, %arg1: i32, %arg2: memref<64x4xi32, #tpu.memory_space<vmem>>, %arg3: memref<1x4xi32, #tpu.memory_space<vmem>>, %arg4: memref<128x1xf32, #tpu.memory_space<vmem>>, %arg5: memref<1x1xf32, #tpu.memory_space<vmem>>, %arg6: memref<64x1xf32, #tpu.memory_space<vmem>>, %arg7: memref<64x1xf32, #tpu.memory_space<vmem>>) attributes {dimension_semantics = [#tpu.dimension_semantics<parallel>, #tpu.dimension_semantics<arbitrary>], iteration_bounds = array<i64: 2, 1>, scalar_prefetch = 0 : i64, scratch_operands = 1 : i64, tpu.core_type = #tpu.core_type<tc>, window_params = [{transform_indices = @transform_0, window_bounds = array<i64: 64, 4>}, {pipeline_mode = #tpu.pipeline_mode<synchronous>, transform_indices = @transform_1, window_bounds = array<i64: 1, 4>}, {transform_indices = @transform_2, window_bounds = array<i64: 128, 1>}, {pipeline_mode = #tpu.pipeline_mode<synchronous>, transform_indices = @transform_3, window_bounds = array<i64: 1, 1>}, {transform_indices = @transform_4, window_bounds = array<i64: 64, 1>}]} {
    %c0_i32 = arith.constant 0 : i32
    %0 = arith.cmpi eq, %arg1, %c0_i32 : i32
    %1 = arith.extui %0 : i1 to i32
    %c0_i32_0 = arith.constant 0 : i32
    %2 = arith.cmpi ne, %1, %c0_i32_0 : i32
    scf.if %2 {
      %cst_13 = arith.constant 0.000000e+00 : f32
      %44 = vector.broadcast %cst_13 : f32 to vector<64x1xf32>
      %c0_14 = arith.constant 0 : index
      %c0_15 = arith.constant 0 : index
      %45 = vector.load %arg7[%c0_14, %c0_15] : memref<64x1xf32, #tpu.memory_space<vmem>>, vector<64x1xf32>
      tpu.vector_store %arg7[%c0_14, %c0_15], %44 {strides = array<i32>} : memref<64x1xf32, #tpu.memory_space<vmem>>, vector<64x1xf32>,
    } else {
    }
    %c0 = arith.constant 0 : index
    %c0_1 = arith.constant 0 : index
    %3 = vector.load %arg2[%c0, %c0_1] : memref<64x4xi32, #tpu.memory_space<vmem>>, vector<64x4xi32>
    %c0_2 = arith.constant 0 : index
    %c0_3 = arith.constant 0 : index
    %4 = vector.load %arg3[%c0_2, %c0_3] : memref<1x4xi32, #tpu.memory_space<vmem>>, vector<1x4xi32>
    %5 = vector.broadcast %4 : vector<1x4xi32> to vector<64x4xi32>
    %6 = arith.addi %3, %5 : vector<64x4xi32>
    %c128_i32 = arith.constant 128 : i32
    %7 = arith.muli %arg1, %c128_i32 : i32
    %8 = vector.broadcast %7 : i32 to vector<64x4xi32>
    %9 = arith.subi %6, %8 : vector<64x4xi32>
    %10 = tpu.iota {dimensions = array<i32: 1>} : vector<64x128xi32>
    %cst = arith.constant 0.000000e+00 : f32
    %11 = vector.broadcast %cst : f32 to vector<64x128xf32>
    %12 = vector.extract_strided_slice %9 {offsets = [0, 0], sizes = [64, 1], strides = [1, 1]} : vector<64x4xi32> to vector<64x1xi32>
    %13 = vector.broadcast %12 : vector<64x1xi32> to vector<64x128xi32>
    %14 = arith.cmpi eq, %13, %10 : vector<64x128xi32>
    %15 = arith.extui %14 : vector<64x128xi1> to vector<64x128xi32>
    %16 = arith.sitofp %15 : vector<64x128xi32> to vector<64x128xf32>
    %17 = arith.addf %11, %16 : vector<64x128xf32>
    %18 = vector.extract_strided_slice %9 {offsets = [0, 1], sizes = [64, 1], strides = [1, 1]} : vector<64x4xi32> to vector<64x1xi32>
    %19 = vector.broadcast %18 : vector<64x1xi32> to vector<64x128xi32>
    %20 = arith.cmpi eq, %19, %10 : vector<64x128xi32>
    %21 = arith.extui %20 : vector<64x128xi1> to vector<64x128xi32>
    %22 = arith.sitofp %21 : vector<64x128xi32> to vector<64x128xf32>
    %23 = arith.addf %17, %22 : vector<64x128xf32>
    %24 = vector.extract_strided_slice %9 {offsets = [0, 2], sizes = [64, 1], strides = [1, 1]} : vector<64x4xi32> to vector<64x1xi32>
    %25 = vector.broadcast %24 : vector<64x1xi32> to vector<64x128xi32>
    %26 = arith.cmpi eq, %25, %10 : vector<64x128xi32>
    %27 = arith.extui %26 : vector<64x128xi1> to vector<64x128xi32>
    %28 = arith.sitofp %27 : vector<64x128xi32> to vector<64x128xf32>
    %29 = arith.addf %23, %28 : vector<64x128xf32>
    %30 = vector.extract_strided_slice %9 {offsets = [0, 3], sizes = [64, 1], strides = [1, 1]} : vector<64x4xi32> to vector<64x1xi32>
    %31 = vector.broadcast %30 : vector<64x1xi32> to vector<64x128xi32>
    %32 = arith.cmpi eq, %31, %10 : vector<64x128xi32>
    %33 = arith.extui %32 : vector<64x128xi1> to vector<64x128xi32>
    %34 = arith.sitofp %33 : vector<64x128xi32> to vector<64x128xf32>
    %35 = arith.addf %29, %34 : vector<64x128xf32>
    %c0_4 = arith.constant 0 : index
    %c0_5 = arith.constant 0 : index
    %36 = vector.load %arg7[%c0_4, %c0_5] : memref<64x1xf32, #tpu.memory_space<vmem>>, vector<64x1xf32>
    %c0_6 = arith.constant 0 : index
    %c0_7 = arith.constant 0 : index
    %37 = vector.load %arg4[%c0_6, %c0_7] : memref<128x1xf32, #tpu.memory_space<vmem>>, vector<128x1xf32>
    %cst_8 = arith.constant dense<0.000000e+00> : vector<64x1xf32>
    %38 = tpu.matmul %35, %37, %cst_8 {dimension_numbers = #tpu.dot_dimension_numbers<[1], [0], [0], [1], [0, 0, 1, 1], [], []>} : vector<64x128xf32>, vector<128x1xf32>, vector<64x1xf32> -> vector<64x1xf32>
    %39 = arith.addf %36, %38 : vector<64x1xf32>
    %c0_9 = arith.constant 0 : index
    %c0_10 = arith.constant 0 : index
    %40 = vector.load %arg7[%c0_9, %c0_10] : memref<64x1xf32, #tpu.memory_space<vmem>>, vector<64x1xf32>
    tpu.vector_store %arg7[%c0_9, %c0_10], %39 {strides = array<i32>} : memref<64x1xf32, #tpu.memory_space<vmem>>, vector<64x1xf32>,
    %c0_i32_11 = arith.constant 0 : i32
    %41 = arith.cmpi eq, %arg1, %c0_i32_11 : i32
    %42 = arith.extui %41 : i1 to i32
    %c0_i32_12 = arith.constant 0 : i32
    %43 = arith.cmpi ne, %42, %c0_i32_12 : i32
    scf.if %43 {
      %c0_13 = arith.constant 0 : index
      %c0_14 = arith.constant 0 : index
      %44 = vector.load %arg7[%c0_13, %c0_14] : memref<64x1xf32, #tpu.memory_space<vmem>>, vector<64x1xf32>
      %c0_15 = arith.constant 0 : index
      %c0_16 = arith.constant 0 : index
      %45 = vector.load %arg5[%c0_15, %c0_16] : memref<1x1xf32, #tpu.memory_space<vmem>>, vector<1x1xf32>
      %46 = vector.broadcast %45 : vector<1x1xf32> to vector<64x1xf32>
      %47 = arith.addf %44, %46 : vector<64x1xf32>
      %c0_17 = arith.constant 0 : index
      %c0_18 = arith.constant 0 : index
      %48 = vector.load %arg6[%c0_17, %c0_18] : memref<64x1xf32, #tpu.memory_space<vmem>>, vector<64x1xf32>
      tpu.vector_store %arg6[%c0_17, %c0_18], %47 {strides = array<i32>} : memref<64x1xf32, #tpu.memory_space<vmem>>, vector<64x1xf32>,
    } else {
    }
    return
  }
  func.func @transform_0(%arg0: i32, %arg1: i32) -> (i32, i32) {
    %c0_i32 = arith.constant 0 : i32
    %c0_i32_0 = arith.constant 0 : i32
    return %arg0, %c0_i32 : i32, i32
  }
  func.func @transform_1(%arg0: i32, %arg1: i32) -> (i32, i32) {
    %c0_i32 = arith.constant 0 : i32
    %c0_i32_0 = arith.constant 0 : i32
    %c0_i32_1 = arith.constant 0 : i32
    return %c0_i32, %c0_i32_0 : i32, i32
  }
  func.func @transform_2(%arg0: i32, %arg1: i32) -> (i32, i32) {
    %c0_i32 = arith.constant 0 : i32
    %c0_i32_0 = arith.constant 0 : i32
    return %arg1, %c0_i32 : i32, i32
  }
  func.func @transform_3(%arg0: i32, %arg1: i32) -> (i32, i32) {
    %c0_i32 = arith.constant 0 : i32
    %c0_i32_0 = arith.constant 0 : i32
    %c0_i32_1 = arith.constant 0 : i32
    return %c0_i32, %c0_i32_0 : i32, i32
  }
  func.func @transform_4(%arg0: i32, %arg1: i32) -> (i32, i32) {
    %c0_i32 = arith.constant 0 : i32
    %c0_i32_0 = arith.constant 0 : i32
    return %arg0, %c0_i32 : i32, i32
  }
}

</mosaic_0001>

<llo_original>
// kernel: tpu_custom_call.1
$region0: #{tpu_custom_call.1}
  #allocation0 [shape = 'u32[]', space=smem, size = 0x4, offset = 0x4, fixed_abs, tag = 'smem constant byte address 0x4 - core index']
  #allocation1 [shape = 'u32[144,128]{1,0:T(1,128)}', space=vmem, size = 0x12000, scoped, tag = 'internal scratch']
  #allocation2 [shape = 'f32[64,1]{1,0:T(8,128)}', space=vmem, size = 0x8000, scoped, tag = 'scratch operand']
  #allocation3 [shape = 'f32[1,1]{1,0:T(1,128)S(1)}', space=vmem, size = 0x200, scoped, tag = 'scoped memory for tpu_custom_call.1']
  %s0 = inlined_call_operand.vmem [shape: s32[128,4], index: 0, kind: input, shape index: {}]
  %s1 = inlined_call_operand.vmem [shape: s32[1,4], index: 1, kind: input, shape index: {}]
  %s2 = inlined_call_operand.vmem [shape: f32[128,1], index: 2, kind: input, shape index: {}]
  %s3 = inlined_call_operand.<no memory space> [shape: f32[1,1], index: 3, kind: input, shape index: {}]
  %s4 = inlined_call_operand.vmem [shape: f32[128,1], index: 4, kind: output, shape index: {}]
  %s5 = sld [smem:[#allocation0]]
  $region57: #{tpu_custom_call.1} parent=0
    _
  %s7 = ssub.s32 1, %s5
  %s8 = scalar_select 0, %s7, %s5
  %v9 = vstv %s3
  %10 = vst [vmem:[#allocation3] sm:$0x1] %v9
  loop: start=0, step=1, limit=4
  $region2: #{tpu_custom_call.1} parent=0 // loop_pre_header
    _
  $region3: #{tpu_custom_call.1} parent=0 // loop_header
    %s12 = sphi 0, %s16
    %p13 = scmp.ge.s32.totalorder %s12, 4
    %s19 = sphi 0, %s31
    %s20 = sphi 0, %s27
    %s21 = sphi 0, %s19
    %s22 = sphi 0, %s20
    %s23 = sphi 0, %s21
    %s24 = sphi 0, %s22
    %s34 = sphi 0, %s36
    %s37 = sphi 0, %s34
    %s38 = sphi 0, %s37
    %s54 = sphi 0, %s38
    %s58 = sphi 0, %s58
    %s60 = sphi 0, %s58
    %s61 = sphi 0, %s60
    %s75 = sphi 0, %s61
    %s81 = sphi 0, %s83
    %s84 = sphi 0, %s81
    %s85 = sphi 0, %s84
    %s101 = sphi 0, %s85
    %s105 = sphi 0, %s105
    %s107 = sphi 0, %s105
    %s108 = sphi 0, %s107
    %s122 = sphi 0, %s108
    %s128 = sphi 0, %s130
    %s131 = sphi 0, %s128
    %s132 = sphi 0, %s131
    %s148 = sphi 0, %s132
  $region4: #{tpu_custom_call.1} parent=0 // loop_header_branch
    %15 = sbr.rel (%p13) target = $region8
  $region5: #{tpu_custom_call.1} parent=0 // loop_body
    %s17 = ssub.s32 %s12, 1
    %s18 = ssub.s32 %s12, 2
    %s25 = sadd.s32 1, %s20
    %p26 = scmp.ge.s32.totalorder %s25, 1
    %s27 = scalar_select %p26, 0, %s25
    %s28 = sadd.s32 1, %s19
    %s29 = scalar_select %p26, %s28, %s19
    %p30 = scmp.ge.s32.totalorder %s29, 2
    %s31 = scalar_select %p30, 0, %s29
    %s32 = ssub.s32 %s19, %s31
    %p33 = scmp.eq.s32.totalorder %s32, 0
    %s35 = sadd.s32 %s34, 1
    %s36 = scalar_select %p33, %s34, %s35
    %p39 = pneg %p33
    %p40 = scmp.eq.s32.totalorder %s12, 1
    %p41 = por %p39, %p40
    %p42 = scmp.ne.s32.totalorder %s34, %s37
    %p43 = scmp.eq.s32.totalorder %s12, 0
    %p44 = por %p42, %p43
    %p45 = scmp.ne.s32.totalorder %s34, %s37
    %p46 = scmp.eq.s32.totalorder %s17, 1
    %p47 = por %p45, %p46
    %p48 = scmp.ne.s32.totalorder %s37, %s38
    %p49 = scmp.eq.s32.totalorder %s17, 0
    %p50 = por %p48, %p49
    %p51 = scmp.ne.s32.totalorder %s37, %s38
    %p52 = scmp.eq.s32.totalorder %s18, 1
    %p53 = por %p51, %p52
    %p55 = scmp.ne.s32.totalorder %s38, %s54
    %p56 = scmp.eq.s32.totalorder %s18, 0
    %p57 = por %p55, %p56
    %s59 = sadd.s32 %s58, 1
    %p62 = scmp.eq.s32.totalorder %s12, 1
    %p63 = scmp.ne.s32.totalorder %s58, %s60
    %p64 = scmp.eq.s32.totalorder %s12, 0
    %p65 = por %p63, %p64
    %p66 = scmp.ne.s32.totalorder %s58, %s60
    %p67 = scmp.eq.s32.totalorder %s17, 1
    %p68 = por %p66, %p67
    %p69 = scmp.ne.s32.totalorder %s60, %s61
    %p70 = scmp.eq.s32.totalorder %s17, 0
    %p71 = por %p69, %p70
    %p72 = scmp.ne.s32.totalorder %s60, %s61
    %p73 = scmp.eq.s32.totalorder %s18, 1
    %p74 = por %p72, %p73
    %p76 = scmp.ne.s32.totalorder %s61, %s75
    %p77 = scmp.eq.s32.totalorder %s18, 0
    %p78 = por %p76, %p77
    %s79 = ssub.s32 %s20, %s27
    %p80 = scmp.eq.s32.totalorder %s79, 0
    %s82 = sadd.s32 %s81, 1
    %s83 = scalar_select %p80, %s81, %s82
    %p86 = pneg %p80
    %p87 = scmp.eq.s32.totalorder %s12, 1
    %p88 = por %p86, %p87
    %p89 = scmp.ne.s32.totalorder %s81, %s84
    %p90 = scmp.eq.s32.totalorder %s12, 0
    %p91 = por %p89, %p90
    %p92 = scmp.ne.s32.totalorder %s81, %s84
    %p93 = scmp.eq.s32.totalorder %s17, 1
    %p94 = por %p92, %p93
    %p95 = scmp.ne.s32.totalorder %s84, %s85
    %p96 = scmp.eq.s32.totalorder %s17, 0
    %p97 = por %p95, %p96
    %p98 = scmp.ne.s32.totalorder %s84, %s85
    %p99 = scmp.eq.s32.totalorder %s18, 1
    %p100 = por %p98, %p99
    %p102 = scmp.ne.s32.totalorder %s85, %s101
    %p103 = scmp.eq.s32.totalorder %s18, 0
    %p104 = por %p102, %p103
    %s106 = sadd.s32 %s105, 1
    %p109 = scmp.eq.s32.totalorder %s12, 1
    %p110 = scmp.ne.s32.totalorder %s105, %s107
    %p111 = scmp.eq.s32.totalorder %s12, 0
    %p112 = por %p110, %p111
    %p113 = scmp.ne.s32.totalorder %s105, %s107
    %p114 = scmp.eq.s32.totalorder %s17, 1
    %p115 = por %p113, %p114
    %p116 = scmp.ne.s32.totalorder %s107, %s108
    %p117 = scmp.eq.s32.totalorder %s17, 0
    %p118 = por %p116, %p117
    %p119 = scmp.ne.s32.totalorder %s107, %s108
    %p120 = scmp.eq.s32.totalorder %s18, 1
    %p121 = por %p119, %p120
    %p123 = scmp.ne.s32.totalorder %s108, %s122
    %p124 = scmp.eq.s32.totalorder %s18, 0
    %p125 = por %p123, %p124
    %s126 = ssub.s32 %s19, %s31
    %p127 = scmp.eq.s32.totalorder %s126, 0
    %s129 = sadd.s32 %s128, 1
    %s130 = scalar_select %p127, %s128, %s129
    %p133 = pneg %p127
    %p134 = scmp.eq.s32.totalorder %s12, 1
    %p135 = por %p133, %p134
    %p136 = scmp.ne.s32.totalorder %s128, %s131
    %p137 = scmp.eq.s32.totalorder %s12, 0
    %p138 = por %p136, %p137
    %p139 = scmp.ne.s32.totalorder %s128, %s131
    %p140 = scmp.eq.s32.totalorder %s17, 1
    %p141 = por %p139, %p140
    %p142 = scmp.ne.s32.totalorder %s131, %s132
    %p143 = scmp.eq.s32.totalorder %s17, 0
    %p144 = por %p142, %p143
    %p145 = scmp.ne.s32.totalorder %s131, %s132
    %p146 = scmp.eq.s32.totalorder %s18, 1
    %p147 = por %p145, %p146
    %p149 = scmp.ne.s32.totalorder %s132, %s148
    %p150 = scmp.eq.s32.totalorder %s18, 0
    %p151 = por %p149, %p150
    %p152 = scmp.le.s32.totalorder 1, %s12
    %p153 = scmp.lt.s32.totalorder %s12, 3
    %p154 = pnand %p152, %p153
    %p155 = pneg %p154
    // Predicated region
    $region9: #{tpu_custom_call.1} parent=5 // pred_check
      _
    $region10: #{tpu_custom_call.1} parent=5 // pred_check_branch
      %157 = sbr.rel (%p154) target = $region12
    $region11: #{tpu_custom_call.1} parent=5 // pred_region
      %s158 = ssub.s32 %s12, 1
      // Predicated region
      $region13: #{tpu_custom_call.1} parent=11 // pred_check
        %p159 = pneg %p71
      $region14: #{tpu_custom_call.1} parent=11 // pred_check_branch
        %161 = sbr.rel (%p159) target = $region16
      $region15: #{tpu_custom_call.1} parent=11 // pred_region
        _
      $region16: #{tpu_custom_call.1} parent=11 // pred_fallthru
        _
      // Predicated region
      $region17: #{tpu_custom_call.1} parent=11 // pred_check
        %p162 = pneg %p97
      $region18: #{tpu_custom_call.1} parent=11 // pred_check_branch
        %164 = sbr.rel (%p162) target = $region20
      $region19: #{tpu_custom_call.1} parent=11 // pred_region
        %s165 = smul.u32 16, %s22
        %p166 = scmp.lt.s32.totalorder %s165, 15
        %s167 = scalar_select %p166, %s165, 15
        %s168 = smul.addr %s167, 8
        %s169 = scalar_lea.vmem %s2, %s168
        %s170 = smul.u32 16, %s22
      $region20: #{tpu_custom_call.1} parent=11 // pred_fallthru
        _
      // Predicated region
      $region21: #{tpu_custom_call.1} parent=11 // pred_check
        %p171 = pneg %p118
      $region22: #{tpu_custom_call.1} parent=11 // pred_check_branch
        %173 = sbr.rel (%p171) target = $region24
      $region23: #{tpu_custom_call.1} parent=11 // pred_region
        _
      $region24: #{tpu_custom_call.1} parent=11 // pred_fallthru
        _
    $region12: #{tpu_custom_call.1} parent=5 // pred_fallthru
      _
    %p174 = scmp.lt.s32.totalorder %s12, 2
    // Predicated region
    $region25: #{tpu_custom_call.1} parent=5 // pred_check
      %p175 = pneg %p174
    $region26: #{tpu_custom_call.1} parent=5 // pred_check_branch
      %177 = sbr.rel (%p175) target = $region28
    $region27: #{tpu_custom_call.1} parent=5 // pred_region
      // Predicated region
      $region29: #{tpu_custom_call.1} parent=27 // pred_check
        %p178 = pneg %p44
      $region30: #{tpu_custom_call.1} parent=27 // pred_check_branch
        %180 = sbr.rel (%p178) target = $region32
      $region31: #{tpu_custom_call.1} parent=27 // pred_region
        %s181 = smul.u32 8, %s19
        %p182 = scmp.lt.s32.totalorder %s181, 15
        %s183 = scalar_select %p182, %s181, 15
        %s184 = smul.addr %s183, 8
        %s185 = scalar_lea.vmem %s0, %s184
        %s186 = smul.u32 8, %s19
      $region32: #{tpu_custom_call.1} parent=27 // pred_fallthru
        _
    $region28: #{tpu_custom_call.1} parent=5 // pred_fallthru
      _
    %p187 = scmp.le.s32.totalorder 1, %s12
    %p188 = scmp.lt.s32.totalorder %s12, 3
    %p189 = pnand %p187, %p188
    %p190 = pneg %p189
    // Predicated region
    $region33: #{tpu_custom_call.1} parent=5 // pred_check
      _
    $region34: #{tpu_custom_call.1} parent=5 // pred_check_branch
      %192 = sbr.rel (%p189) target = $region36
    $region35: #{tpu_custom_call.1} parent=5 // pred_region
      %s193 = ssub.s32 %s12, 1
      %s194 = smul.u32 8, %s21
      %p195 = scmp.lt.s32.totalorder %s194, 15
      %s196 = scalar_select %p195, %s194, 15
      %s197 = smul.addr %s196, 8
      %s198 = scalar_lea.vmem %s0, %s197
      %p199 = pneg %p50
      %p200 = pneg %p47
      %p201 = pneg %p71
      %p202 = pneg %p68
      %s203 = smul.u32 16, %s22
      %p204 = scmp.lt.s32.totalorder %s203, 15
      %s205 = scalar_select %p204, %s203, 15
      %s206 = smul.addr %s205, 8
      %s207 = scalar_lea.vmem %s2, %s206
      %p208 = pneg %p97
      %p209 = pneg %p94
      %p210 = pneg %p118
      %p211 = pneg %p115
      %p212 = pneg %p144
      %p213 = pneg %p141
      %s214 = smul.u32 8, %s21
      %p215 = scmp.lt.s32.totalorder %s214, 15
      %s216 = scalar_select %p215, %s214, 15
      %s217 = smul.addr %s216, 8
      %s218 = scalar_lea.vmem %s4, %s217
      %s219 = smul.u32 8, %s21
      %p220 = scmp.lt.s32.totalorder %s219, 15
      %s221 = scalar_select %p220, %s219, 15
      %s222 = smul.addr %s221, 8
      %s223 = scalar_lea.vmem %s0, %s222
      %s224 = smul.u32 8, %s21
      %s225 = smul.u32 16, %s22
      %p226 = scmp.lt.s32.totalorder %s225, 15
      %s227 = scalar_select %p226, %s225, 15
      %s228 = smul.addr %s227, 8
      %s229 = scalar_lea.vmem %s2, %s228
      %s230 = smul.u32 16, %s22
      %s231 = smul.u32 8, %s21
      %p232 = scmp.lt.s32.totalorder %s231, 15
      %s233 = scalar_select %p232, %s231, 15
      %s234 = smul.addr %s233, 8
      %s235 = scalar_lea.vmem %s4, %s234
      %s236 = smul.u32 8, %s21
      %p237 = scmp.eq.s32.totalorder %s22, 0
      // Predicated region
      $region37: #{tpu_custom_call.1} parent=35 // pred_check
        %p238 = pneg %p237
      $region38: #{tpu_custom_call.1} parent=35 // pred_check_branch
        %240 = sbr.rel (%p238) target = $region40
      $region39: #{tpu_custom_call.1} parent=35 // pred_region
        %vm241 = vcmask 7168
        %242 = vst.msk [vmem:[#allocation2] sm:$0xff] %vm241, 0.0
        %243 = vst.msk [vmem:[#allocation2 + $0x8] sm:$0xff] %vm241, 0.0
        %244 = vst.msk [vmem:[#allocation2 + $0x10] sm:$0xff] %vm241, 0.0
        %245 = vst.msk [vmem:[#allocation2 + $0x18] sm:$0xff] %vm241, 0.0
        %246 = vst.msk [vmem:[#allocation2 + $0x20] sm:$0xff] %vm241, 0.0
        %247 = vst.msk [vmem:[#allocation2 + $0x28] sm:$0xff] %vm241, 0.0
        %248 = vst.msk [vmem:[#allocation2 + $0x30] sm:$0xff] %vm241, 0.0
        %249 = vst.msk [vmem:[#allocation2 + $0x38] sm:$0xff] %vm241, 0.0
      $region40: #{tpu_custom_call.1} parent=35 // pred_fallthru
        _
      %v250 = vld [vmem:[%s223] sm:$0xff]
      %v251 = vld [vmem:[%s223 + $0x8] sm:$0xff]
      %v252 = vld [vmem:[%s223 + $0x10] sm:$0xff]
      %v253 = vld [vmem:[%s223 + $0x18] sm:$0xff]
      %v254 = vld [vmem:[%s223 + $0x20] sm:$0xff]
      %v255 = vld [vmem:[%s223 + $0x28] sm:$0xff]
      %v256 = vld [vmem:[%s223 + $0x30] sm:$0xff]
      %v257 = vld [vmem:[%s223 + $0x38] sm:$0xff]
      %v258 = vld [vmem:[%s1] sm:$0x1]
      %v259 = vlaneseq
      %v260 = vshrl.u32 %v259, 7
      %v261 = vsub.s32 0, %v260
      %v262 = vrot.slane %v258, %v261
      %v263 = vadd.s32 %v250, %v262
      %v264 = vadd.s32 %v251, %v262
      %v265 = vadd.s32 %v252, %v262
      %v266 = vadd.s32 %v253, %v262
      %v267 = vadd.s32 %v254, %v262
      %v268 = vadd.s32 %v255, %v262
      %v269 = vadd.s32 %v256, %v262
      %v270 = vadd.s32 %v257, %v262
      %s271 = smul.u32 %s22, 128
      %v272 = vstv %s271
      %v273 = vsub.s32 %v263, %v272
      %v274 = vsub.s32 %v264, %v272
      %v275 = vsub.s32 %v265, %v272
      %v276 = vsub.s32 %v266, %v272
      %v277 = vsub.s32 %v267, %v272
      %v278 = vsub.s32 %v268, %v272
      %v279 = vsub.s32 %v269, %v272
      %v280 = vsub.s32 %v270, %v272
      %v281 = vlaneseq
      %v282 = vand.u32 %v281, 127
      %283 = vset.pattern.permute.xlu0 0
      %284 = vperm.xlu0 %283, %v273
      %v285 = vpop.permute.xlu0 %284
      %286 = vset.pattern.permute.xlu0 0
      %287 = vperm.xlu0 %286, %v274
      %v288 = vpop.permute.xlu0 %287
      %289 = vset.pattern.permute.xlu0 0
      %290 = vperm.xlu0 %289, %v275
      %v291 = vpop.permute.xlu0 %290
      %292 = vset.pattern.permute.xlu0 0
      %293 = vperm.xlu0 %292, %v276
      %v294 = vpop.permute.xlu0 %293
      %295 = vset.pattern.permute.xlu0 0
      %296 = vperm.xlu0 %295, %v277
      %v297 = vpop.permute.xlu0 %296
      %298 = vset.pattern.permute.xlu0 0
      %299 = vperm.xlu0 %298, %v278
      %v300 = vpop.permute.xlu0 %299
      %301 = vset.pattern.permute.xlu0 0
      %302 = vperm.xlu0 %301, %v279
      %v303 = vpop.permute.xlu0 %302
      %304 = vset.pattern.permute.xlu0 0
      %305 = vperm.xlu0 %304, %v280
      %v306 = vpop.permute.xlu0 %305
      %vm307 = vcmp.eq.s32.totalorder %v285, %v282
      %vm308 = vcmp.eq.s32.totalorder %v288, %v282
      %vm309 = vcmp.eq.s32.totalorder %v291, %v282
      %vm310 = vcmp.eq.s32.totalorder %v294, %v282
      %vm311 = vcmp.eq.s32.totalorder %v297, %v282
      %vm312 = vcmp.eq.s32.totalorder %v300, %v282
      %vm313 = vcmp.eq.s32.totalorder %v303, %v282
      %vm314 = vcmp.eq.s32.totalorder %v306, %v282
      %v315 = vsel %vm307, 1, 0
      %v316 = vsel %vm308, 1, 0
      %v317 = vsel %vm309, 1, 0
      %v318 = vsel %vm310, 1, 0
      %v319 = vsel %vm311, 1, 0
      %v320 = vsel %vm312, 1, 0
      %v321 = vsel %vm313, 1, 0
      %v322 = vsel %vm314, 1, 0
      %v323 = vcvt.s32.f32 %v315
      %v324 = vcvt.s32.f32 %v316
      %v325 = vcvt.s32.f32 %v317
      %v326 = vcvt.s32.f32 %v318
      %v327 = vcvt.s32.f32 %v319
      %v328 = vcvt.s32.f32 %v320
      %v329 = vcvt.s32.f32 %v321
      %v330 = vcvt.s32.f32 %v322
      %v331 = vadd.f32 %v323, 0.0
      %v332 = vadd.f32 %v324, 0.0
      %v333 = vadd.f32 %v325, 0.0
      %v334 = vadd.f32 %v326, 0.0
      %v335 = vadd.f32 %v327, 0.0
      %v336 = vadd.f32 %v328, 0.0
      %v337 = vadd.f32 %v329, 0.0
      %v338 = vadd.f32 %v330, 0.0
      %339 = vset.pattern.permute.xlu0 1
      %340 = vperm.xlu0 %339, %v273
      %v341 = vpop.permute.xlu0 %340
      %342 = vset.pattern.permute.xlu0 1
      %343 = vperm.xlu0 %342, %v274
      %v344 = vpop.permute.xlu0 %343
      %345 = vset.pattern.permute.xlu0 1
      %346 = vperm.xlu0 %345, %v275
      %v347 = vpop.permute.xlu0 %346
      %348 = vset.pattern.permute.xlu0 1
      %349 = vperm.xlu0 %348, %v276
      %v350 = vpop.permute.xlu0 %349
      %351 = vset.pattern.permute.xlu0 1
      %352 = vperm.xlu0 %351, %v277
      %v353 = vpop.permute.xlu0 %352
      %354 = vset.pattern.permute.xlu0 1
      %355 = vperm.xlu0 %354, %v278
      %v356 = vpop.permute.xlu0 %355
      %357 = vset.pattern.permute.xlu0 1
      %358 = vperm.xlu0 %357, %v279
      %v359 = vpop.permute.xlu0 %358
      %360 = vset.pattern.permute.xlu0 1
      %361 = vperm.xlu0 %360, %v280
      %v362 = vpop.permute.xlu0 %361
      %vm363 = vcmp.eq.s32.totalorder %v341, %v282
      %vm364 = vcmp.eq.s32.totalorder %v344, %v282
      %vm365 = vcmp.eq.s32.totalorder %v347, %v282
      %vm366 = vcmp.eq.s32.totalorder %v350, %v282
      %vm367 = vcmp.eq.s32.totalorder %v353, %v282
      %vm368 = vcmp.eq.s32.totalorder %v356, %v282
      %vm369 = vcmp.eq.s32.totalorder %v359, %v282
      %vm370 = vcmp.eq.s32.totalorder %v362, %v282
      %v371 = vsel %vm363, 1, 0
      %v372 = vsel %vm364, 1, 0
      %v373 = vsel %vm365, 1, 0
      %v374 = vsel %vm366, 1, 0
      %v375 = vsel %vm367, 1, 0
      %v376 = vsel %vm368, 1, 0
      %v377 = vsel %vm369, 1, 0
      %v378 = vsel %vm370, 1, 0
      %v379 = vcvt.s32.f32 %v371
      %v380 = vcvt.s32.f32 %v372
      %v381 = vcvt.s32.f32 %v373
      %v382 = vcvt.s32.f32 %v374
      %v383 = vcvt.s32.f32 %v375
      %v384 = vcvt.s32.f32 %v376
      %v385 = vcvt.s32.f32 %v377
      %v386 = vcvt.s32.f32 %v378
      %v387 = vadd.f32 %v331, %v379
      %v388 = vadd.f32 %v332, %v380
      %v389 = vadd.f32 %v333, %v381
      %v390 = vadd.f32 %v334, %v382
      %v391 = vadd.f32 %v335, %v383
      %v392 = vadd.f32 %v336, %v384
      %v393 = vadd.f32 %v337, %v385
      %v394 = vadd.f32 %v338, %v386
      %395 = vset.pattern.permute.xlu0 2
      %396 = vperm.xlu0 %395, %v273
      %v397 = vpop.permute.xlu0 %396
      %398 = vset.pattern.permute.xlu0 2
      %399 = vperm.xlu0 %398, %v274
      %v400 = vpop.permute.xlu0 %399
      %401 = vset.pattern.permute.xlu0 2
      %402 = vperm.xlu0 %401, %v275
      %v403 = vpop.permute.xlu0 %402
      %404 = vset.pattern.permute.xlu0 2
      %405 = vperm.xlu0 %404, %v276
      %v406 = vpop.permute.xlu0 %405
      %407 = vset.pattern.permute.xlu0 2
      %408 = vperm.xlu0 %407, %v277
      %v409 = vpop.permute.xlu0 %408
      %410 = vset.pattern.permute.xlu0 2
      %411 = vperm.xlu0 %410, %v278
      %v412 = vpop.permute.xlu0 %411
      %413 = vset.pattern.permute.xlu0 2
      %414 = vperm.xlu0 %413, %v279
      %v415 = vpop.permute.xlu0 %414
      %416 = vset.pattern.permute.xlu0 2
      %417 = vperm.xlu0 %416, %v280
      %v418 = vpop.permute.xlu0 %417
      %vm419 = vcmp.eq.s32.totalorder %v397, %v282
      %vm420 = vcmp.eq.s32.totalorder %v400, %v282
      %vm421 = vcmp.eq.s32.totalorder %v403, %v282
      %vm422 = vcmp.eq.s32.totalorder %v406, %v282
      %vm423 = vcmp.eq.s32.totalorder %v409, %v282
      %vm424 = vcmp.eq.s32.totalorder %v412, %v282
      %vm425 = vcmp.eq.s32.totalorder %v415, %v282
      %vm426 = vcmp.eq.s32.totalorder %v418, %v282
      %v427 = vsel %vm419, 1, 0
      %v428 = vsel %vm420, 1, 0
      %v429 = vsel %vm421, 1, 0
      %v430 = vsel %vm422, 1, 0
      %v431 = vsel %vm423, 1, 0
      %v432 = vsel %vm424, 1, 0
      %v433 = vsel %vm425, 1, 0
      %v434 = vsel %vm426, 1, 0
      %v435 = vcvt.s32.f32 %v427
      %v436 = vcvt.s32.f32 %v428
      %v437 = vcvt.s32.f32 %v429
      %v438 = vcvt.s32.f32 %v430
      %v439 = vcvt.s32.f32 %v431
      %v440 = vcvt.s32.f32 %v432
      %v441 = vcvt.s32.f32 %v433
      %v442 = vcvt.s32.f32 %v434
      %v443 = vadd.f32 %v387, %v435
      %v444 = vadd.f32 %v388, %v436
      %v445 = vadd.f32 %v389, %v437
      %v446 = vadd.f32 %v390, %v438
      %v447 = vadd.f32 %v391, %v439
      %v448 = vadd.f32 %v392, %v440
      %v449 = vadd.f32 %v393, %v441
      %v450 = vadd.f32 %v394, %v442
      %451 = vset.pattern.permute.xlu0 3
      %452 = vperm.xlu0 %451, %v273
      %v453 = vpop.permute.xlu0 %452
      %454 = vset.pattern.permute.xlu0 3
      %455 = vperm.xlu0 %454, %v274
      %v456 = vpop.permute.xlu0 %455
      %457 = vset.pattern.permute.xlu0 3
      %458 = vperm.xlu0 %457, %v275
      %v459 = vpop.permute.xlu0 %458
      %460 = vset.pattern.permute.xlu0 3
      %461 = vperm.xlu0 %460, %v276
      %v462 = vpop.permute.xlu0 %461
      %463 = vset.pattern.permute.xlu0 3
      %464 = vperm.xlu0 %463, %v277
      %v465 = vpop.permute.xlu0 %464
      %466 = vset.pattern.permute.xlu0 3
      %467 = vperm.xlu0 %466, %v278
      %v468 = vpop.permute.xlu0 %467
      %469 = vset.pattern.permute.xlu0 3
      %470 = vperm.xlu0 %469, %v279
      %v471 = vpop.permute.xlu0 %470
      %472 = vset.pattern.permute.xlu0 3
      %473 = vperm.xlu0 %472, %v280
      %v474 = vpop.permute.xlu0 %473
      %vm475 = vcmp.eq.s32.totalorder %v453, %v282
      %vm476 = vcmp.eq.s32.totalorder %v456, %v282
      %vm477 = vcmp.eq.s32.totalorder %v459, %v282
      %vm478 = vcmp.eq.s32.totalorder %v462, %v282
      %vm479 = vcmp.eq.s32.totalorder %v465, %v282
      %vm480 = vcmp.eq.s32.totalorder %v468, %v282
      %vm481 = vcmp.eq.s32.totalorder %v471, %v282
      %vm482 = vcmp.eq.s32.totalorder %v474, %v282
      %v483 = vsel %vm475, 1, 0
      %v484 = vsel %vm476, 1, 0
      %v485 = vsel %vm477, 1, 0
      %v486 = vsel %vm478, 1, 0
      %v487 = vsel %vm479, 1, 0
      %v488 = vsel %vm480, 1, 0
      %v489 = vsel %vm481, 1, 0
      %v490 = vsel %vm482, 1, 0
      %v491 = vcvt.s32.f32 %v483
      %v492 = vcvt.s32.f32 %v484
      %v493 = vcvt.s32.f32 %v485
      %v494 = vcvt.s32.f32 %v486
      %v495 = vcvt.s32.f32 %v487
      %v496 = vcvt.s32.f32 %v488
      %v497 = vcvt.s32.f32 %v489
      %v498 = vcvt.s32.f32 %v490
      %v499 = vadd.f32 %v443, %v491
      %v500 = vadd.f32 %v444, %v492
      %v501 = vadd.f32 %v445, %v493
      %v502 = vadd.f32 %v446, %v494
      %v503 = vadd.f32 %v447, %v495
      %v504 = vadd.f32 %v448, %v496
      %v505 = vadd.f32 %v449, %v497
      %v506 = vadd.f32 %v450, %v498
      %v507 = vld [vmem:[#allocation2] sm:$0xff]
      %v508 = vld [vmem:[#allocation2 + $0x8] sm:$0xff]
      %v509 = vld [vmem:[#allocation2 + $0x10] sm:$0xff]
      %v510 = vld [vmem:[#allocation2 + $0x18] sm:$0xff]
      %v511 = vld [vmem:[#allocation2 + $0x20] sm:$0xff]
      %v512 = vld [vmem:[#allocation2 + $0x28] sm:$0xff]
      %v513 = vld [vmem:[#allocation2 + $0x30] sm:$0xff]
      %v514 = vld [vmem:[#allocation2 + $0x38] sm:$0xff]
      %v515 = vld [vmem:[%s229] sm:$0xff]
      %v516 = vld [vmem:[%s229 + $0x8] sm:$0xff]
      %v517 = vld [vmem:[%s229 + $0x10] sm:$0xff]
      %v518 = vld [vmem:[%s229 + $0x18] sm:$0xff]
      %v519 = vld [vmem:[%s229 + $0x20] sm:$0xff]
      %v520 = vld [vmem:[%s229 + $0x28] sm:$0xff]
      %v521 = vld [vmem:[%s229 + $0x30] sm:$0xff]
      %v522 = vld [vmem:[%s229 + $0x38] sm:$0xff]
      %v523 = vld [vmem:[%s229 + $0x40] sm:$0xff]
      %v524 = vld [vmem:[%s229 + $0x48] sm:$0xff]
      %v525 = vld [vmem:[%s229 + $0x50] sm:$0xff]
      %v526 = vld [vmem:[%s229 + $0x58] sm:$0xff]
      %v527 = vld [vmem:[%s229 + $0x60] sm:$0xff]
      %v528 = vld [vmem:[%s229 + $0x68] sm:$0xff]
      %v529 = vld [vmem:[%s229 + $0x70] sm:$0xff]
      %v530 = vld [vmem:[%s229 + $0x78] sm:$0xff]
      %531 = vmatprep.subr.mxu0 0.0
      %532 = vmatpush1.msra.mxu0 %v515
      %533 = vmatprep.subr.mxu0 0.0
      %534 = vmatpush1.msra.mxu0 %v516
      %535 = vmatprep.subr.mxu0 0.0
      %536 = vmatpush1.msra.mxu0 %v517
      %537 = vmatprep.subr.mxu0 0.0
      %538 = vmatpush1.msra.mxu0 %v518
      %539 = vmatprep.subr.mxu0 0.0
      %540 = vmatpush1.msra.mxu0 %v519
      %541 = vmatprep.subr.mxu0 0.0
      %542 = vmatpush1.msra.mxu0 %v520
      %543 = vmatprep.subr.mxu0 0.0
      %544 = vmatpush1.msra.mxu0 %v521
      %545 = vmatprep.subr.mxu0 0.0
      %546 = vmatpush1.msra.mxu0 %v522
      %547 = vmatprep.subr.mxu0 0.0
      %548 = vmatpush1.msra.mxu0 %v523
      %549 = vmatprep.subr.mxu0 0.0
      %550 = vmatpush1.msra.mxu0 %v524
      %551 = vmatprep.subr.mxu0 0.0
      %552 = vmatpush1.msra.mxu0 %v525
      %553 = vmatprep.subr.mxu0 0.0
      %554 = vmatpush1.msra.mxu0 %v526
      %555 = vmatprep.subr.mxu0 0.0
      %556 = vmatpush1.msra.mxu0 %v527
      %557 = vmatprep.subr.mxu0 0.0
      %558 = vmatpush1.msra.mxu0 %v528
      %559 = vmatprep.subr.mxu0 0.0
      %560 = vmatpush1.msra.mxu0 %v529
      %561 = vmatprep.subr.mxu0 0.0
      %562 = vmatpush1.msra.mxu0 %v530
      %563 = vmatprep.subr.mxu0 0.0
      %564 = vmatpush1.msra.mxu0 0.0
      %565 = vmatprep.subr.mxu0 0.0
      %566 = vmatpush1.msra.mxu0 0.0
      %567 = vmatprep.subr.mxu0 0.0
      %568 = vmatpush1.msra.mxu0 0.0
      %569 = vmatprep.subr.mxu0 0.0
      %570 = vmatpush1.msra.mxu0 0.0
      %571 = vmatprep.subr.mxu0 0.0
      %572 = vmatpush1.msra.mxu0 0.0
      %573 = vmatprep.subr.mxu0 0.0
      %574 = vmatpush1.msra.mxu0 0.0
      %575 = vmatprep.subr.mxu0 0.0
      %576 = vmatpush1.msra.mxu0 0.0
      %577 = vmatprep.subr.mxu0 0.0
      %578 = vmatpush1.msra.mxu0 0.0
      %579 = vmatprep.subr.mxu0 0.0
      %580 = vmatpush1.msra.mxu0 0.0
      %581 = vmatprep.subr.mxu0 0.0
      %582 = vmatpush1.msra.mxu0 0.0
      %583 = vmatprep.subr.mxu0 0.0
      %584 = vmatpush1.msra.mxu0 0.0
      %585 = vmatprep.subr.mxu0 0.0
      %586 = vmatpush1.msra.mxu0 0.0
      %587 = vmatprep.subr.mxu0 0.0
      %588 = vmatpush1.msra.mxu0 0.0
      %589 = vmatprep.subr.mxu0 0.0
      %590 = vmatpush1.msra.mxu0 0.0
      %591 = vmatprep.subr.mxu0 0.0
      %592 = vmatpush1.msra.mxu0 0.0
      %593 = vmatprep.subr.mxu0 0.0
      %594 = vmatpush1.msra.mxu0 0.0
      %595 = vmatprep.mubr.f32.mxu0 0.0
      %596 = vmatmul.mubr.f32.gmra.mrb[0].mxu0 %v499
      %v597 = vpop.f32.mrb[0].mxu0
      %v598 = vadd.f32 0.0, %v597
      %v599 = vpop.f32.mrb[0].mxu0
      %600 = vmatprep.mubr.f32.mxu0 0.0
      %601 = vmatmul.mubr.f32.gmra.mrb[0].mxu0 %v500
      %v602 = vpop.f32.mrb[0].mxu0
      %v603 = vadd.f32 0.0, %v602
      %v604 = vpop.f32.mrb[0].mxu0
      %605 = vmatprep.mubr.f32.mxu0 0.0
      %606 = vmatmul.mubr.f32.gmra.mrb[0].mxu0 %v501
      %v607 = vpop.f32.mrb[0].mxu0
      %v608 = vadd.f32 0.0, %v607
      %v609 = vpop.f32.mrb[0].mxu0
      %610 = vmatprep.mubr.f32.mxu0 0.0
      %611 = vmatmul.mubr.f32.gmra.mrb[0].mxu0 %v502
      %v612 = vpop.f32.mrb[0].mxu0
      %v613 = vadd.f32 0.0, %v612
      %v614 = vpop.f32.mrb[0].mxu0
      %615 = vmatprep.mubr.f32.mxu0 0.0
      %616 = vmatmul.mubr.f32.gmra.mrb[0].mxu0 %v503
      %v617 = vpop.f32.mrb[0].mxu0
      %v618 = vadd.f32 0.0, %v617
      %v619 = vpop.f32.mrb[0].mxu0
      %620 = vmatprep.mubr.f32.mxu0 0.0
      %621 = vmatmul.mubr.f32.gmra.mrb[0].mxu0 %v504
      %v622 = vpop.f32.mrb[0].mxu0
      %v623 = vadd.f32 0.0, %v622
      %v624 = vpop.f32.mrb[0].mxu0
      %625 = vmatprep.mubr.f32.mxu0 0.0
      %626 = vmatmul.mubr.f32.gmra.mrb[0].mxu0 %v505
      %v627 = vpop.f32.mrb[0].mxu0
      %v628 = vadd.f32 0.0, %v627
      %v629 = vpop.f32.mrb[0].mxu0
      %630 = vmatprep.mubr.f32.mxu0 0.0
      %631 = vmatmul.mubr.f32.gmra.mrb[0].mxu0 %v506
      %v632 = vpop.f32.mrb[0].mxu0
      %v633 = vadd.f32 0.0, %v632
      %v634 = vpop.f32.mrb[0].mxu0
      %635 = vdwg.mxu0
      %v636 = vadd.f32 %v507, %v598
      %v637 = vadd.f32 %v508, %v603
      %v638 = vadd.f32 %v509, %v608
      %v639 = vadd.f32 %v510, %v613
      %v640 = vadd.f32 %v511, %v618
      %v641 = vadd.f32 %v512, %v623
      %v642 = vadd.f32 %v513, %v628
      %v643 = vadd.f32 %v514, %v633
      %vm644 = vcmask 7168
      %645 = vst.msk [vmem:[#allocation2] sm:$0xff] %vm644, %v636
      %646 = vst.msk [vmem:[#allocation2 + $0x8] sm:$0xff] %vm644, %v637
      %647 = vst.msk [vmem:[#allocation2 + $0x10] sm:$0xff] %vm644, %v638
      %648 = vst.msk [vmem:[#allocation2 + $0x18] sm:$0xff] %vm644, %v639
      %649 = vst.msk [vmem:[#allocation2 + $0x20] sm:$0xff] %vm644, %v640
      %650 = vst.msk [vmem:[#allocation2 + $0x28] sm:$0xff] %vm644, %v641
      %651 = vst.msk [vmem:[#allocation2 + $0x30] sm:$0xff] %vm644, %v642
      %652 = vst.msk [vmem:[#allocation2 + $0x38] sm:$0xff] %vm644, %v643
      // Predicated region
      $region41: #{tpu_custom_call.1} parent=35 // pred_check
        %p653 = pneg %p237
      $region42: #{tpu_custom_call.1} parent=35 // pred_check_branch
        %655 = sbr.rel (%p653) target = $region44
      $region43: #{tpu_custom_call.1} parent=35 // pred_region
        %v656 = vld [vmem:[#allocation2] sm:$0xff]
        %v657 = vld [vmem:[#allocation2 + $0x8] sm:$0xff]
        %v658 = vld [vmem:[#allocation2 + $0x10] sm:$0xff]
        %v659 = vld [vmem:[#allocation2 + $0x18] sm:$0xff]
        %v660 = vld [vmem:[#allocation2 + $0x20] sm:$0xff]
        %v661 = vld [vmem:[#allocation2 + $0x28] sm:$0xff]
        %v662 = vld [vmem:[#allocation2 + $0x30] sm:$0xff]
        %v663 = vld [vmem:[#allocation2 + $0x38] sm:$0xff]
        %v664 = vld [vmem:[#allocation3] sm:$0x1]
        %v666 = vlaneseq
        %v667 = vshrl.u32 %v666, 7
        %v668 = vsub.s32 0, %v667
        %v669 = vrot.slane %v664, %v668
        %v671 = vadd.f32 %v656, %v669
        %v672 = vadd.f32 %v657, %v669
        %v673 = vadd.f32 %v658, %v669
        %v674 = vadd.f32 %v659, %v669
        %v675 = vadd.f32 %v660, %v669
        %v676 = vadd.f32 %v661, %v669
        %v677 = vadd.f32 %v662, %v669
        %v678 = vadd.f32 %v663, %v669
        %679 = vst.msk [vmem:[%s235] sm:$0xff] %vm644, %v671
        %680 = vst.msk [vmem:[%s235 + $0x8] sm:$0xff] %vm644, %v672
        %681 = vst.msk [vmem:[%s235 + $0x10] sm:$0xff] %vm644, %v673
        %682 = vst.msk [vmem:[%s235 + $0x18] sm:$0xff] %vm644, %v674
        %683 = vst.msk [vmem:[%s235 + $0x20] sm:$0xff] %vm644, %v675
        %684 = vst.msk [vmem:[%s235 + $0x28] sm:$0xff] %vm644, %v676
        %685 = vst.msk [vmem:[%s235 + $0x30] sm:$0xff] %vm644, %v677
        %686 = vst.msk [vmem:[%s235 + $0x38] sm:$0xff] %vm644, %v678
      $region44: #{tpu_custom_call.1} parent=35 // pred_fallthru
        _
      %s687 = smul.u32 8, %s21
      %p688 = scmp.lt.s32.totalorder %s687, 15
      %s689 = scalar_select %p688, %s687, 15
      %s690 = smul.addr %s689, 8
      %s691 = scalar_lea.vmem %s4, %s690
      // Predicated region
      $region45: #{tpu_custom_call.1} parent=35 // pred_check
        %p692 = pneg %p141
      $region46: #{tpu_custom_call.1} parent=35 // pred_check_branch
        %694 = sbr.rel (%p692) target = $region48
      $region47: #{tpu_custom_call.1} parent=35 // pred_region
        %s695 = smul.u32 8, %s21
      $region48: #{tpu_custom_call.1} parent=35 // pred_fallthru
        _
    $region36: #{tpu_custom_call.1} parent=5 // pred_fallthru
      _
    %p696 = scmp.le.s32.totalorder 2, %s12
    // Predicated region
    $region49: #{tpu_custom_call.1} parent=5 // pred_check
      %p697 = pneg %p696
    $region50: #{tpu_custom_call.1} parent=5 // pred_check_branch
      %699 = sbr.rel (%p697) target = $region52
    $region51: #{tpu_custom_call.1} parent=5 // pred_region
      %s700 = ssub.s32 %s12, 2
      // Predicated region
      $region53: #{tpu_custom_call.1} parent=51 // pred_check
        %p701 = pneg %p147
      $region54: #{tpu_custom_call.1} parent=51 // pred_check_branch
        %703 = sbr.rel (%p701) target = $region56
      $region55: #{tpu_custom_call.1} parent=51 // pred_region
        %s704 = smul.u32 8, %s23
        %p705 = scmp.lt.s32.totalorder %s704, 15
        %s706 = scalar_select %p705, %s704, 15
        %s707 = smul.addr %s706, 8
        %s708 = scalar_lea.vmem %s4, %s707
      $region56: #{tpu_custom_call.1} parent=51 // pred_fallthru
        _
    $region52: #{tpu_custom_call.1} parent=5 // pred_fallthru
      _
  $region6: #{tpu_custom_call.1} parent=0 // loop_footer
    %s16 = sadd.s32 1, %s12
  $region7: #{tpu_custom_call.1} parent=0 // loop_footer_branch
    %11 = sbr.rel target = $region3
  $region8: #{tpu_custom_call.1} parent=0 // loop_exit
    _

</llo_original>
